<compile_context>
chip_gen: v6e
topology: v6e:2x2x1
jax: 0.10.0
libtpu: 0.0.40
codegen_flags: <defaults>
</compile_context>

<pallas_src>
import functools
import math

import jax
import jax.numpy as jnp
from jax import lax
from jax.experimental import pallas as pl
from jax.experimental.pallas import tpu as pltpu


def _round_up(x, m):
    return ((x + m - 1) // m) * m


def _attention_kernel(q_ref, kt_ref, v_ref, out_ref, w_ref, *, sk_valid):
    # q_ref  : (block_q, Dk_p) bf16 -- heads folded into rows, pre-scaled by 1/sqrt(d_k)
    # kt_ref : (Dk_p, Sk_p)    bf16 -- K pre-transposed, Sk on the lane axis
    # v_ref  : (Sk_p, Dv_p)    bf16
    # out_ref: (block_q, Dv_p) f32
    # w_ref  : (block_q, Sk_p) f32
    scores = jnp.dot(q_ref[...], kt_ref[...],
                     preferred_element_type=jnp.float32)        # (block_q, Sk_p)

    if sk_valid is not None:
        # Mask zero-padded key columns so they don't perturb the softmax.
        col = lax.broadcasted_iota(jnp.int32, scores.shape, 1)
        scores = jnp.where(col < sk_valid, scores, -1e30)

    # Numerically-stable softmax along Sk (f32 throughout).
    m = jnp.max(scores, axis=-1, keepdims=True)
    e = jnp.exp(scores - m)
    denom = jnp.sum(e, axis=-1, keepdims=True)
    weights = e * pl.reciprocal(denom, approx=True)             # EUP slot (~free)

    out = jnp.dot(weights.astype(v_ref.dtype), v_ref[...],
                  preferred_element_type=jnp.float32)           # (block_q, Dv_p)

    out_ref[...] = out
    w_ref[...] = weights


def _pick_block_q(m, dk_p, dv_p, sk_p, vmem_budget):
    """Largest MXU/VMEM-friendly q block whose resident footprint fits the budget."""
    m_pad = _round_up(max(m, 1), 8)
    cands = {c for c in (512, 256, 128, 64, 32, 16, 8) if c <= m_pad}
    if m_pad <= 512:
        cands.add(m_pad)
    cands = sorted(cands, reverse=True)

    def footprint(bq):
        bf16, f32 = 2, 4
        q_in = 2 * bq * dk_p * bf16            # double-buffered Q tile
        kt_in = 2 * dk_p * sk_p * bf16         # double-buffered K^T tile
        v_in = 2 * sk_p * dv_p * bf16          # double-buffered V tile
        o_out = 2 * bq * dv_p * f32            # double-buffered output tile
        w_out = 2 * bq * sk_p * f32            # double-buffered weights tile
        live = bq * sk_p * 3 * f32 + bq * dv_p * f32   # scores / e / weights / out
        return q_in + kt_in + v_in + o_out + w_out + live

    for bq in cands:
        if footprint(bq) <= vmem_budget:
            return bq, footprint(bq)
    return cands[-1], footprint(cands[-1])


def attention(query, key, value, *, compute_dtype=jnp.bfloat16):
    B, H, Sq, Dk = query.shape
    Bk, Sk, Dk2 = key.shape
    assert B == Bk and Dk == Dk2
    Dv = value.shape[-1]

    M = H * Sq                        # heads folded into the matmul M dimension
    Dk_p = _round_up(Dk, 128)         # lane-dense contraction dim (unmasked loads)
    Dv_p = _round_up(Dv, 128)         # lane-dense output stores
    Sk_p = _round_up(Sk, 128)         # lane-dense scores / weights slab

    # Per-generation VMEM budget (v5e/v6e 128 MiB, v7x 64 MiB).
    try:
        vmem_cap = int(pltpu.get_tpu_info().vmem_capacity_bytes)
    except Exception:
        vmem_cap = 64 * 1024 * 1024   # conservative (v7x-sized) fallback
    block_q, footprint = _pick_block_q(M, Dk_p, Dv_p, Sk_p, int(0.40 * vmem_cap))
    M_p = _round_up(M, block_q)
    n_q = M_p // block_q

    # Fold 1/sqrt(d_k) into Q in f32 (fuses with the pad + bf16 cast below).
    inv_scale = 1.0 / math.sqrt(Dk)
    q_flat = query.astype(jnp.float32).reshape(B, M, Dk) * inv_scale
    q_flat = jnp.pad(q_flat, ((0, 0), (0, M_p - M), (0, Dk_p - Dk)))
    q_flat = q_flat.astype(compute_dtype)

    # Zero-pad K/V (zeros are a no-op in the dot products; padded score
    # columns are masked in-kernel) and pre-transpose K once in HBM.
    k_pad = jnp.pad(key.astype(jnp.float32),
                    ((0, 0), (0, Sk_p - Sk), (0, Dk_p - Dk)))
    kT = jnp.swapaxes(k_pad, -1, -2).astype(compute_dtype)        # (B, Dk_p, Sk_p)
    v_pad = jnp.pad(value.astype(jnp.float32),
                    ((0, 0), (0, Sk_p - Sk), (0, Dv_p - Dv))).astype(compute_dtype)

    kernel = functools.partial(
        _attention_kernel, sk_valid=None if Sk == Sk_p else Sk)

    vmem_limit = int(min(0.9 * vmem_cap, max(32 * 1024 * 1024, 2 * footprint)))

    out, weights = pl.pallas_call(
        kernel,
        out_shape=(
            jax.ShapeDtypeStruct((B, M_p, Dv_p), jnp.float32),
            jax.ShapeDtypeStruct((B, M_p, Sk_p), jnp.float32),
        ),
        grid_spec=pltpu.PrefetchScalarGridSpec(
            num_scalar_prefetch=0,
            # B outermost: the K/V block index (b, 0, 0) is constant across the
            # inner q-block axis, so K/V are DMA'd once per batch.
            grid=(B, n_q),
            in_specs=[
                pl.BlockSpec((None, block_q, Dk_p), lambda b, qi: (b, qi, 0)),
                pl.BlockSpec((None, Dk_p, Sk_p), lambda b, qi: (b, 0, 0)),
                pl.BlockSpec((None, Sk_p, Dv_p), lambda b, qi: (b, 0, 0)),
            ],
            out_specs=[
                pl.BlockSpec((None, block_q, Dv_p), lambda b, qi: (b, qi, 0)),
                pl.BlockSpec((None, block_q, Sk_p), lambda b, qi: (b, qi, 0)),
            ],
        ),
        compiler_params=pltpu.CompilerParams(
            dimension_semantics=("parallel", "parallel"),
            vmem_limit_bytes=vmem_limit,
        ),
    )(q_flat, kT, v_pad)

    out = out[:, :M, :Dv].reshape(B, H, Sq, Dv)
    weights = weights[:, :M, :Sk].reshape(B, H, Sq, Sk)
    return out, weights


def attention_ref(query, key, value):
    # Pure-JAX reference mirroring the PyTorch forward.
    Dk = query.shape[-1]
    k = key[:, None, :, :]        # (B, 1, Sk, Dk)
    v = value[:, None, :, :]      # (B, 1, Sk, Dv)
    scores = jnp.matmul(query, jnp.swapaxes(k, -2, -1)) / jnp.sqrt(jnp.float32(Dk))
    weights = jax.nn.softmax(scores, axis=-1)
    out = jnp.matmul(weights, v)
    return out, weights


if __name__ == "__main__":
    d_k = 8
    d_v = 8
    batch_size = 2
    num_heads = 3
    seq_len_q = 4
    seq_len_k = 5

    root = jax.random.PRNGKey(0)
    kq, kk, kv = jax.random.split(root, 3)
    query = jax.random.uniform(
        kq, (batch_size, num_heads, seq_len_q, d_k), dtype=jnp.float32)
    key = jax.random.uniform(kk, (batch_size, seq_len_k, d_k), dtype=jnp.float32)
    value = jax.random.uniform(kv, (batch_size, seq_len_k, d_v), dtype=jnp.float32)

    out, weights = attention(query, key, value)
    jax.block_until_ready((out, weights))

    out_r, w_r = attention_ref(query, key, value)
    # Tolerance accounts for bf16 MXU operands + EUP approximate reciprocal;
    # observed error is well below this bound for these shapes.
    assert out.shape == out_r.shape and weights.shape == w_r.shape
    assert jnp.allclose(out, out_r, atol=2e-2, rtol=2e-2), "output mismatch"
    assert jnp.allclose(weights, w_r, atol=2e-2, rtol=2e-2), "weights mismatch"

    print("KERNEL_OK")
</pallas_src>

<mosaic_0001>
module attributes {stable_mosaic.version = 11 : i64} {
  func.func @_attention_kernel(%arg0: i32, %arg1: i32, %arg2: memref<1x16x128xbf16, #tpu.memory_space<vmem>>, %arg3: memref<1x128x128xbf16, #tpu.memory_space<vmem>>, %arg4: memref<1x128x128xbf16, #tpu.memory_space<vmem>>, %arg5: memref<1x16x128xf32, #tpu.memory_space<vmem>>, %arg6: memref<1x16x128xf32, #tpu.memory_space<vmem>>) attributes {dimension_semantics = [#tpu.dimension_semantics<parallel>, #tpu.dimension_semantics<parallel>], iteration_bounds = array<i64: 2, 1>, scalar_prefetch = 0 : i64, scratch_operands = 0 : i64, tpu.core_type = #tpu.core_type<tc>, window_params = [{transform_indices = @transform_0, window_bounds = array<i64: 1, 16, 128>}, {transform_indices = @transform_1, window_bounds = array<i64: 1, 128, 128>}, {transform_indices = @transform_2, window_bounds = array<i64: 1, 128, 128>}, {transform_indices = @transform_3, window_bounds = array<i64: 1, 16, 128>}, {transform_indices = @transform_4, window_bounds = array<i64: 1, 16, 128>}]} {
    %c0 = arith.constant 0 : index
    %c0_0 = arith.constant 0 : index
    %c0_1 = arith.constant 0 : index
    %0 = vector.load %arg2[%c0, %c0_0, %c0_1] : memref<1x16x128xbf16, #tpu.memory_space<vmem>>, vector<1x16x128xbf16>
    %1 = vector.shape_cast %0 : vector<1x16x128xbf16> to vector<16x128xbf16>
    %c0_2 = arith.constant 0 : index
    %c0_3 = arith.constant 0 : index
    %c0_4 = arith.constant 0 : index
    %2 = vector.load %arg3[%c0_2, %c0_3, %c0_4] : memref<1x128x128xbf16, #tpu.memory_space<vmem>>, vector<1x128x128xbf16>
    %3 = vector.shape_cast %2 : vector<1x128x128xbf16> to vector<128x128xbf16>
    %cst = arith.constant dense<0.000000e+00> : vector<16x128xf32>
    %4 = tpu.matmul %1, %3, %cst {dimension_numbers = #tpu.dot_dimension_numbers<[1], [0], [0], [1], [0, 0, 1, 1], [], []>} : vector<16x128xbf16>, vector<128x128xbf16>, vector<16x128xf32> -> vector<16x128xf32>
    %5 = tpu.iota {dimensions = array<i32: 1>} : vector<16x128xi32>
    %c5_i32 = arith.constant 5 : i32
    %6 = vector.broadcast %c5_i32 : i32 to vector<16x128xi32>
    %7 = arith.cmpi slt, %5, %6 : vector<16x128xi32>
    %cst_5 = arith.constant -1.000000e+30 : f32
    %8 = vector.broadcast %cst_5 : f32 to vector<16x128xf32>
    %9 = arith.select %7, %4, %8 : vector<16x128xi1>, vector<16x128xf32>
    %cst_6 = arith.constant dense<0xFF800000> : vector<16xf32>
    %10 = vector.multi_reduction <maximumf>, %9, %cst_6 [1] : vector<16x128xf32> to vector<16xf32>
    %11 = vector.shape_cast %10 : vector<16xf32> to vector<16x1xf32>
    %12 = vector.broadcast %11 : vector<16x1xf32> to vector<16x128xf32>
    %13 = arith.subf %9, %12 : vector<16x128xf32>
    %14 = math.exp %13 : vector<16x128xf32>
    %cst_7 = arith.constant dense<0.000000e+00> : vector<16xf32>
    %15 = vector.multi_reduction <add>, %14, %cst_7 [1] : vector<16x128xf32> to vector<16xf32>
    %16 = vector.shape_cast %15 : vector<16xf32> to vector<16x1xf32>
    %17 = tpu.reciprocal %16 {approx = true} : vector<16x1xf32> -> vector<16x1xf32>
    %18 = vector.broadcast %17 : vector<16x1xf32> to vector<16x128xf32>
    %19 = arith.mulf %14, %18 : vector<16x128xf32>
    %20 = arith.truncf %19 : vector<16x128xf32> to vector<16x128xbf16>
    %c0_8 = arith.constant 0 : index
    %c0_9 = arith.constant 0 : index
    %c0_10 = arith.constant 0 : index
    %21 = vector.load %arg4[%c0_8, %c0_9, %c0_10] : memref<1x128x128xbf16, #tpu.memory_space<vmem>>, vector<1x128x128xbf16>
    %22 = vector.shape_cast %21 : vector<1x128x128xbf16> to vector<128x128xbf16>
    %cst_11 = arith.constant dense<0.000000e+00> : vector<16x128xf32>
    %23 = tpu.matmul %20, %22, %cst_11 {dimension_numbers = #tpu.dot_dimension_numbers<[1], [0], [0], [1], [0, 0, 1, 1], [], []>} : vector<16x128xbf16>, vector<128x128xbf16>, vector<16x128xf32> -> vector<16x128xf32>
    %c0_12 = arith.constant 0 : index
    %c0_13 = arith.constant 0 : index
    %c0_14 = arith.constant 0 : index
    %24 = vector.load %arg5[%c0_12, %c0_13, %c0_14] : memref<1x16x128xf32, #tpu.memory_space<vmem>>, vector<1x16x128xf32>
    %25 = vector.shape_cast %24 : vector<1x16x128xf32> to vector<16x128xf32>
    %26 = vector.shape_cast %23 : vector<16x128xf32> to vector<1x16x128xf32>
    tpu.vector_store %arg5[%c0_12, %c0_13, %c0_14], %26 {strides = array<i32>} : memref<1x16x128xf32, #tpu.memory_space<vmem>>, vector<1x16x128xf32>,
    %c0_15 = arith.constant 0 : index
    %c0_16 = arith.constant 0 : index
    %c0_17 = arith.constant 0 : index
    %27 = vector.load %arg6[%c0_15, %c0_16, %c0_17] : memref<1x16x128xf32, #tpu.memory_space<vmem>>, vector<1x16x128xf32>
    %28 = vector.shape_cast %27 : vector<1x16x128xf32> to vector<16x128xf32>
    %29 = vector.shape_cast %19 : vector<16x128xf32> to vector<1x16x128xf32>
    tpu.vector_store %arg6[%c0_15, %c0_16, %c0_17], %29 {strides = array<i32>} : memref<1x16x128xf32, #tpu.memory_space<vmem>>, vector<1x16x128xf32>,
    return
  }
  func.func @transform_0(%arg0: i32, %arg1: i32) -> (i32, i32, i32) {
    %c0_i32 = arith.constant 0 : i32
    %c0_i32_0 = arith.constant 0 : i32
    return %arg0, %arg1, %c0_i32 : i32, i32, i32
  }
  func.func @transform_1(%arg0: i32, %arg1: i32) -> (i32, i32, i32) {
    %c0_i32 = arith.constant 0 : i32
    %c0_i32_0 = arith.constant 0 : i32
    %c0_i32_1 = arith.constant 0 : i32
    return %arg0, %c0_i32, %c0_i32_0 : i32, i32, i32
  }
  func.func @transform_2(%arg0: i32, %arg1: i32) -> (i32, i32, i32) {
    %c0_i32 = arith.constant 0 : i32
    %c0_i32_0 = arith.constant 0 : i32
    %c0_i32_1 = arith.constant 0 : i32
    return %arg0, %c0_i32, %c0_i32_0 : i32, i32, i32
  }
  func.func @transform_3(%arg0: i32, %arg1: i32) -> (i32, i32, i32) {
    %c0_i32 = arith.constant 0 : i32
    %c0_i32_0 = arith.constant 0 : i32
    return %arg0, %arg1, %c0_i32 : i32, i32, i32
  }
  func.func @transform_4(%arg0: i32, %arg1: i32) -> (i32, i32, i32) {
    %c0_i32 = arith.constant 0 : i32
    %c0_i32_0 = arith.constant 0 : i32
    return %arg0, %arg1, %c0_i32 : i32, i32, i32
  }
}

</mosaic_0001>

<llo_original>
// kernel: tpu_custom_call.1
$region0: #{tpu_custom_call.1}
  #allocation0 [shape = 'u32[]', space=smem, size = 0x4, offset = 0x4, fixed_abs, tag = 'smem constant byte address 0x4 - core index']
  #allocation1 [shape = 'u32[144,128]{1,0:T(1,128)}', space=vmem, size = 0x12000, scoped, tag = 'internal scratch']
  %s0 = inlined_call_operand.hbm [shape: bf16[2,16,128], index: 0, kind: input, shape index: {}]
  %s1 = inlined_call_operand.hbm [shape: bf16[2,128,128], index: 1, kind: input, shape index: {}]
  %s2 = inlined_call_operand.hbm [shape: bf16[2,128,128], index: 2, kind: input, shape index: {}]
  %s3 = inlined_call_operand.hbm [shape: f32[2,16,128], index: 3, kind: output, shape index: {0}]
  %s4 = inlined_call_operand.hbm [shape: f32[2,16,128], index: 4, kind: output, shape index: {1}]
  %5 = xla_tuple %s3, %s4
  %s6 = sld [smem:[#allocation0]]
  $region65: #{tpu_custom_call.1} parent=0
    _
  %s8 = ssub.s32 1, %s6
  %s9 = scalar_select 0, %s8, %s6
  $region1: #{tpu_custom_call.1} parent=0
    #allocation2 [shape = 'u8[8192]{0}', space=vmem, size = 0x2000, scoped, tag = 'input window, operand 0']
    #allocation3 [shape = 's32[2]{0}', space=sflag, size = 0x8, scoped, tag = 'scoped memory for tpu_custom_call.1']
    #allocation4 [shape = 's32[2]{0}', space=sflag, size = 0x8, scoped, tag = 'scoped memory for tpu_custom_call.1']
    #allocation5 [shape = 'u8[65536]{0}', space=vmem, size = 0x10000, scoped, tag = 'input window, operand 1']
    #allocation6 [shape = 's32[2]{0}', space=sflag, size = 0x8, scoped, tag = 'scoped memory for tpu_custom_call.1']
    #allocation7 [shape = 'u8[65536]{0}', space=vmem, size = 0x10000, scoped, tag = 'input window, operand 2']
    #allocation8 [shape = 'u8[16384]{0}', space=vmem, size = 0x4000, scoped, tag = 'output window, operand 0']
    #allocation9 [shape = 'u8[16384]{0}', space=vmem, size = 0x4000, scoped, tag = 'output window, operand 1']
    #allocation10 [shape = 's32[2]{0}', space=sflag, size = 0x8, scoped, tag = 'scoped memory for tpu_custom_call.1']
    %10 = vsyncpa [#allocation3], 0
    %s11 = scalar_lea.sflag [#allocation3], 1
    %12 = vsyncpa %s11, 0
    %13 = vsyncpa [#allocation6], 0
    %s14 = scalar_lea.sflag [#allocation6], 1
    %15 = vsyncpa %s14, 0
    %16 = vsyncpa [#allocation4], 0
    %s17 = scalar_lea.sflag [#allocation4], 1
    %18 = vsyncpa %s17, 0
    %19 = vsyncpa [#allocation10], 0
    %s20 = scalar_lea.sflag [#allocation10], 1
    %21 = vsyncpa %s20, 0
    loop: start=0, step=1, limit=4
    $region2: #{tpu_custom_call.1} parent=1 // loop_pre_header
      _
    $region3: #{tpu_custom_call.1} parent=1 // loop_header
      %s23 = sphi 0, %s27
      %p24 = scmp.ge.s32.totalorder %s23, 4
      %s30 = sphi 0, %s42
      %s31 = sphi 0, %s38
      %s32 = sphi 0, %s30
      %s33 = sphi 0, %s31
      %s34 = sphi 0, %s32
      %s35 = sphi 0, %s33
      %s47 = sphi 0, %s49
      %s50 = sphi 0, %s47
      %s51 = sphi 0, %s50
      %s67 = sphi 0, %s51
      %s73 = sphi 0, %s75
      %s76 = sphi 0, %s73
      %s77 = sphi 0, %s76
      %s93 = sphi 0, %s77
      %s99 = sphi 0, %s101
      %s102 = sphi 0, %s99
      %s103 = sphi 0, %s102
      %s119 = sphi 0, %s103
      %s127 = sphi 0, %s129
      %s130 = sphi 0, %s127
      %s131 = sphi 0, %s130
      %s147 = sphi 0, %s131
      %s155 = sphi 0, %s157
      %s158 = sphi 0, %s155
      %s159 = sphi 0, %s158
      %s175 = sphi 0, %s159
    $region4: #{tpu_custom_call.1} parent=1 // loop_header_branch
      %26 = sbr.rel (%p24) target = $region8
    $region5: #{tpu_custom_call.1} parent=1 // loop_body
      %s28 = ssub.s32 %s23, 1
      %s29 = ssub.s32 %s23, 2
      %s36 = sadd.s32 1, %s31
      %p37 = scmp.ge.s32.totalorder %s36, 1
      %s38 = scalar_select %p37, 0, %s36
      %s39 = sadd.s32 1, %s30
      %s40 = scalar_select %p37, %s39, %s30
      %p41 = scmp.ge.s32.totalorder %s40, 2
      %s42 = scalar_select %p41, 0, %s40
      %s43 = ssub.s32 %s30, %s42
      %s44 = ssub.s32 %s31, %s38
      %s45 = sor.u32 %s43, %s44
      %p46 = scmp.eq.s32.totalorder %s45, 0
      %s48 = sadd.s32 %s47, 1
      %s49 = scalar_select %p46, %s47, %s48
      %p52 = pneg %p46
      %p53 = scmp.eq.s32.totalorder %s23, 1
      %p54 = por %p52, %p53
      %p55 = scmp.ne.s32.totalorder %s47, %s50
      %p56 = scmp.eq.s32.totalorder %s23, 0
      %p57 = por %p55, %p56
      %p58 = scmp.ne.s32.totalorder %s47, %s50
      %p59 = scmp.eq.s32.totalorder %s28, 1
      %p60 = por %p58, %p59
      %p61 = scmp.ne.s32.totalorder %s50, %s51
      %p62 = scmp.eq.s32.totalorder %s28, 0
      %p63 = por %p61, %p62
      %p64 = scmp.ne.s32.totalorder %s50, %s51
      %p65 = scmp.eq.s32.totalorder %s29, 1
      %p66 = por %p64, %p65
      %p68 = scmp.ne.s32.totalorder %s51, %s67
      %p69 = scmp.eq.s32.totalorder %s29, 0
      %p70 = por %p68, %p69
      %s71 = ssub.s32 %s30, %s42
      %p72 = scmp.eq.s32.totalorder %s71, 0
      %s74 = sadd.s32 %s73, 1
      %s75 = scalar_select %p72, %s73, %s74
      %p78 = pneg %p72
      %p79 = scmp.eq.s32.totalorder %s23, 1
      %p80 = por %p78, %p79
      %p81 = scmp.ne.s32.totalorder %s73, %s76
      %p82 = scmp.eq.s32.totalorder %s23, 0
      %p83 = por %p81, %p82
      %p84 = scmp.ne.s32.totalorder %s73, %s76
      %p85 = scmp.eq.s32.totalorder %s28, 1
      %p86 = por %p84, %p85
      %p87 = scmp.ne.s32.totalorder %s76, %s77
      %p88 = scmp.eq.s32.totalorder %s28, 0
      %p89 = por %p87, %p88
      %p90 = scmp.ne.s32.totalorder %s76, %s77
      %p91 = scmp.eq.s32.totalorder %s29, 1
      %p92 = por %p90, %p91
      %p94 = scmp.ne.s32.totalorder %s77, %s93
      %p95 = scmp.eq.s32.totalorder %s29, 0
      %p96 = por %p94, %p95
      %s97 = ssub.s32 %s30, %s42
      %p98 = scmp.eq.s32.totalorder %s97, 0
      %s100 = sadd.s32 %s99, 1
      %s101 = scalar_select %p98, %s99, %s100
      %p104 = pneg %p98
      %p105 = scmp.eq.s32.totalorder %s23, 1
      %p106 = por %p104, %p105
      %p107 = scmp.ne.s32.totalorder %s99, %s102
      %p108 = scmp.eq.s32.totalorder %s23, 0
      %p109 = por %p107, %p108
      %p110 = scmp.ne.s32.totalorder %s99, %s102
      %p111 = scmp.eq.s32.totalorder %s28, 1
      %p112 = por %p110, %p111
      %p113 = scmp.ne.s32.totalorder %s102, %s103
      %p114 = scmp.eq.s32.totalorder %s28, 0
      %p115 = por %p113, %p114
      %p116 = scmp.ne.s32.totalorder %s102, %s103
      %p117 = scmp.eq.s32.totalorder %s29, 1
      %p118 = por %p116, %p117
      %p120 = scmp.ne.s32.totalorder %s103, %s119
      %p121 = scmp.eq.s32.totalorder %s29, 0
      %p122 = por %p120, %p121
      %s123 = ssub.s32 %s30, %s42
      %s124 = ssub.s32 %s31, %s38
      %s125 = sor.u32 %s123, %s124
      %p126 = scmp.eq.s32.totalorder %s125, 0
      %s128 = sadd.s32 %s127, 1
      %s129 = scalar_select %p126, %s127, %s128
      %p132 = pneg %p126
      %p133 = scmp.eq.s32.totalorder %s23, 1
      %p134 = por %p132, %p133
      %p135 = scmp.ne.s32.totalorder %s127, %s130
      %p136 = scmp.eq.s32.totalorder %s23, 0
      %p137 = por %p135, %p136
      %p138 = scmp.ne.s32.totalorder %s127, %s130
      %p139 = scmp.eq.s32.totalorder %s28, 1
      %p140 = por %p138, %p139
      %p141 = scmp.ne.s32.totalorder %s130, %s131
      %p142 = scmp.eq.s32.totalorder %s28, 0
      %p143 = por %p141, %p142
      %p144 = scmp.ne.s32.totalorder %s130, %s131
      %p145 = scmp.eq.s32.totalorder %s29, 1
      %p146 = por %p144, %p145
      %p148 = scmp.ne.s32.totalorder %s131, %s147
      %p149 = scmp.eq.s32.totalorder %s29, 0
      %p150 = por %p148, %p149
      %s151 = ssub.s32 %s30, %s42
      %s152 = ssub.s32 %s31, %s38
      %s153 = sor.u32 %s151, %s152
      %p154 = scmp.eq.s32.totalorder %s153, 0
      %s156 = sadd.s32 %s155, 1
      %s157 = scalar_select %p154, %s155, %s156
      %p160 = pneg %p154
      %p161 = scmp.eq.s32.totalorder %s23, 1
      %p162 = por %p160, %p161
      %p163 = scmp.ne.s32.totalorder %s155, %s158
      %p164 = scmp.eq.s32.totalorder %s23, 0
      %p165 = por %p163, %p164
      %p166 = scmp.ne.s32.totalorder %s155, %s158
      %p167 = scmp.eq.s32.totalorder %s28, 1
      %p168 = por %p166, %p167
      %p169 = scmp.ne.s32.totalorder %s158, %s159
      %p170 = scmp.eq.s32.totalorder %s28, 0
      %p171 = por %p169, %p170
      %p172 = scmp.ne.s32.totalorder %s158, %s159
      %p173 = scmp.eq.s32.totalorder %s29, 1
      %p174 = por %p172, %p173
      %p176 = scmp.ne.s32.totalorder %s159, %s175
      %p177 = scmp.eq.s32.totalorder %s29, 0
      %p178 = por %p176, %p177
      %p179 = scmp.le.s32.totalorder 1, %s23
      %p180 = scmp.lt.s32.totalorder %s23, 3
      %p181 = pnand %p179, %p180
      %p182 = pneg %p181
      // Predicated region
      $region9: #{tpu_custom_call.1} parent=5 // pred_check
        _
      $region10: #{tpu_custom_call.1} parent=5 // pred_check_branch
        %184 = sbr.rel (%p181) target = $region12
      $region11: #{tpu_custom_call.1} parent=5 // pred_region
        %s185 = ssub.s32 %s23, 1
      $region12: #{tpu_custom_call.1} parent=5 // pred_fallthru
        _
      %p186 = scmp.lt.s32.totalorder %s23, 2
      // Predicated region
      $region13: #{tpu_custom_call.1} parent=5 // pred_check
        %p187 = pneg %p186
      $region14: #{tpu_custom_call.1} parent=5 // pred_check_branch
        %189 = sbr.rel (%p187) target = $region16
      $region15: #{tpu_custom_call.1} parent=5 // pred_region
        // Predicated region
        $region17: #{tpu_custom_call.1} parent=15 // pred_check
          %p190 = pneg %p57
        $region18: #{tpu_custom_call.1} parent=15 // pred_check_branch
          %192 = sbr.rel (%p190) target = $region20
        $region19: #{tpu_custom_call.1} parent=15 // pred_region
          %s193 = sand.u32 %s47, 1
          %s194 = scalar_lea.sflag [#allocation3], %s193
          %s195 = sand.u32 %s47, 1
          %s196 = smul.addr %s195, 8
          %s197 = scalar_lea.vmem [#allocation2], %s196
          %s198 = smul.u32 2, %s31
          %s200 = ssub.s32 128, 128
          %201 = vsyncadd %s194, %s200
          %s202 = smul.addr %s30, 2
          %s203 = sadd.s32 %s198, %s202
          %s204 = smul.addr %s203, 64
          %s205 = scalar_lea.hbm %s0, %s204
          %s206 = sshll.u32 %s197, 4
          %s207 = int_to_ptr.vmem [resolvable:$true] %s206
          %212 = dma.hbm_to_vmem [thread:$0]  %s205, 128, %s207, %s194, 64, 64, 4
        $region20: #{tpu_custom_call.1} parent=15 // pred_fallthru
          _
        // Predicated region
        $region21: #{tpu_custom_call.1} parent=15 // pred_check
          %p213 = pneg %p83
        $region22: #{tpu_custom_call.1} parent=15 // pred_check_branch
          %215 = sbr.rel (%p213) target = $region24
        $region23: #{tpu_custom_call.1} parent=15 // pred_region
          %s216 = sand.u32 %s23, 1
          %s217 = scalar_lea.sflag [#allocation6], %s216
          %s218 = sand.u32 %s73, 1
          %s219 = smul.addr %s218, 64
          %s220 = scalar_lea.vmem [#allocation5], %s219
          %s222 = ssub.s32 1024, 1024
          %223 = vsyncadd %s217, %s222
          %s224 = smul.addr %s30, 16
          %s225 = smul.addr %s224, 64
          %s226 = scalar_lea.hbm %s1, %s225
          %s227 = sshll.u32 %s220, 4
          %s228 = int_to_ptr.vmem [resolvable:$true] %s227
          %233 = dma.hbm_to_vmem [thread:$0]  %s226, 1024, %s228, %s217, 64, 64, 4
        $region24: #{tpu_custom_call.1} parent=15 // pred_fallthru
          _
        // Predicated region
        $region25: #{tpu_custom_call.1} parent=15 // pred_check
          %p234 = pneg %p109
        $region26: #{tpu_custom_call.1} parent=15 // pred_check_branch
          %236 = sbr.rel (%p234) target = $region28
        $region27: #{tpu_custom_call.1} parent=15 // pred_region
          %s237 = sand.u32 %s23, 1
          %s238 = scalar_lea.sflag [#allocation6], %s237
          %s239 = sand.u32 %s99, 1
          %s240 = smul.addr %s239, 64
          %s241 = scalar_lea.vmem [#allocation7], %s240
          %s243 = ssub.s32 1024, 1024
          %244 = vsyncadd %s238, %s243
          %s245 = smul.addr %s30, 16
          %s246 = smul.addr %s245, 64
          %s247 = scalar_lea.hbm %s2, %s246
          %s248 = sshll.u32 %s241, 4
          %s249 = int_to_ptr.vmem [resolvable:$true] %s248
          %254 = dma.hbm_to_vmem [thread:$0]  %s247, 1024, %s249, %s238, 64, 64, 4
        $region28: #{tpu_custom_call.1} parent=15 // pred_fallthru
          _
      $region16: #{tpu_custom_call.1} parent=5 // pred_fallthru
        _
      %p255 = scmp.le.s32.totalorder 1, %s23
      %p256 = scmp.lt.s32.totalorder %s23, 3
      %p257 = pnand %p255, %p256
      %p258 = pneg %p257
      // Predicated region
      $region29: #{tpu_custom_call.1} parent=5 // pred_check
        _
      $region30: #{tpu_custom_call.1} parent=5 // pred_check_branch
        %260 = sbr.rel (%p257) target = $region32
      $region31: #{tpu_custom_call.1} parent=5 // pred_region
        %s261 = ssub.s32 %s23, 1
        %s262 = sand.u32 %s50, 1
        %s263 = scalar_lea.sflag [#allocation3], %s262
        %s264 = sand.u32 %s50, 1
        %s265 = smul.addr %s264, 8
        %s266 = scalar_lea.vmem [#allocation2], %s265
        // Predicated region
        $region33: #{tpu_custom_call.1} parent=31 // pred_check
          %p267 = pneg %p63
        $region34: #{tpu_custom_call.1} parent=31 // pred_check_branch
          %269 = sbr.rel (%p267) target = $region36
        $region35: #{tpu_custom_call.1} parent=31 // pred_region
          %270 = dma.done %s263, 128
        $region36: #{tpu_custom_call.1} parent=31 // pred_fallthru
          _
        %s271 = sand.u32 %s28, 1
        %s272 = scalar_lea.sflag [#allocation6], %s271
        %s273 = sand.u32 %s76, 1
        %s274 = smul.addr %s273, 64
        %s275 = scalar_lea.vmem [#allocation5], %s274
        // Predicated region
        $region37: #{tpu_custom_call.1} parent=31 // pred_check
          %p276 = pneg %p89
        $region38: #{tpu_custom_call.1} parent=31 // pred_check_branch
          %278 = sbr.rel (%p276) target = $region40
        $region39: #{tpu_custom_call.1} parent=31 // pred_region
          %279 = dma.done %s272, 1024
        $region40: #{tpu_custom_call.1} parent=31 // pred_fallthru
          _
        %s280 = sand.u32 %s28, 1
        %s281 = scalar_lea.sflag [#allocation6], %s280
        %s282 = sand.u32 %s102, 1
        %s283 = smul.addr %s282, 64
        %s284 = scalar_lea.vmem [#allocation7], %s283
        // Predicated region
        $region41: #{tpu_custom_call.1} parent=31 // pred_check
          %p285 = pneg %p115
        $region42: #{tpu_custom_call.1} parent=31 // pred_check_branch
          %287 = sbr.rel (%p285) target = $region44
        $region43: #{tpu_custom_call.1} parent=31 // pred_region
          %288 = dma.done %s281, 1024
        $region44: #{tpu_custom_call.1} parent=31 // pred_fallthru
          _
        %s289 = sand.u32 %s50, 1
        %s290 = scalar_lea.sflag [#allocation3], %s289
        %s291 = sand.u32 %s50, 1
        %s292 = smul.addr %s291, 8
        %s293 = scalar_lea.vmem [#allocation2], %s292
        %p294 = pneg %p63
        %p295 = pneg %p60
        %s296 = sand.u32 %s28, 1
        %s297 = scalar_lea.sflag [#allocation6], %s296
        %s298 = sand.u32 %s76, 1
        %s299 = smul.addr %s298, 64
        %s300 = scalar_lea.vmem [#allocation5], %s299
        %p301 = pneg %p89
        %p302 = pneg %p86
        %s303 = sand.u32 %s28, 1
        %s304 = scalar_lea.sflag [#allocation6], %s303
        %s305 = sand.u32 %s102, 1
        %s306 = smul.addr %s305, 64
        %s307 = scalar_lea.vmem [#allocation7], %s306
        %p308 = pneg %p115
        %p309 = pneg %p112
        %p310 = pneg %p143
        %p311 = pneg %p140
        %s312 = sand.u32 %s130, 1
        %s313 = scalar_lea.sflag [#allocation4], %s312
        %s314 = sand.u32 %s130, 1
        %s315 = smul.addr %s314, 16
        %s316 = scalar_lea.vmem [#allocation8], %s315
        %p317 = pneg %p171
        %p318 = pneg %p168
        %s319 = sand.u32 %s158, 1
        %s320 = scalar_lea.sflag [#allocation10], %s319
        %s321 = sand.u32 %s158, 1
        %s322 = smul.addr %s321, 16
        %s323 = scalar_lea.vmem [#allocation9], %s322
        %s324 = smul.u32 2, %s33
        %s325 = smul.u32 2, %s33
        %s326 = smul.u32 2, %s33
        %v328 = vld [vmem:[%s266] sm:$0xf]
        %v329 = vld [vmem:[%s266 + $0x4] sm:$0xf]
        %v330 = vld [vmem:[%s275] sm:$0xf]
        %v331 = vld [vmem:[%s275 + $0x4] sm:$0xf]
        %v332 = vld [vmem:[%s275 + $0x8] sm:$0xf]
        %v333 = vld [vmem:[%s275 + $0xc] sm:$0xf]
        %v334 = vld [vmem:[%s275 + $0x10] sm:$0xf]
        %v335 = vld [vmem:[%s275 + $0x14] sm:$0xf]
        %v336 = vld [vmem:[%s275 + $0x18] sm:$0xf]
        %v337 = vld [vmem:[%s275 + $0x1c] sm:$0xf]
        %v338 = vld [vmem:[%s275 + $0x20] sm:$0xf]
        %v339 = vld [vmem:[%s275 + $0x24] sm:$0xf]
        %v340 = vld [vmem:[%s275 + $0x28] sm:$0xf]
        %v341 = vld [vmem:[%s275 + $0x2c] sm:$0xf]
        %v342 = vld [vmem:[%s275 + $0x30] sm:$0xf]
        %v343 = vld [vmem:[%s275 + $0x34] sm:$0xf]
        %v344 = vld [vmem:[%s275 + $0x38] sm:$0xf]
        %v345 = vld [vmem:[%s275 + $0x3c] sm:$0xf]
        %v348 = vunpack.c.l.b16 %v328
        %v349 = vunpack.c.l.b16 %v329
        %v350 = vpack.c.b16 %v349, %v348
        %v368 = vunpack.c.l.b16 %v330
        %v369 = vunpack.c.l.b16 %v331
        %v370 = vunpack.c.l.b16 %v332
        %v371 = vunpack.c.l.b16 %v333
        %v372 = vunpack.c.l.b16 %v334
        %v373 = vunpack.c.l.b16 %v335
        %v374 = vunpack.c.l.b16 %v336
        %v375 = vunpack.c.l.b16 %v337
        %v376 = vunpack.c.l.b16 %v338
        %v377 = vunpack.c.l.b16 %v339
        %v378 = vunpack.c.l.b16 %v340
        %v379 = vunpack.c.l.b16 %v341
        %v380 = vunpack.c.l.b16 %v342
        %v381 = vunpack.c.l.b16 %v343
        %v382 = vunpack.c.l.b16 %v344
        %v383 = vunpack.c.l.b16 %v345
        %v384 = vpack.c.b16 %v369, %v368
        %v385 = vpack.c.b16 %v371, %v370
        %v386 = vpack.c.b16 %v373, %v372
        %v387 = vpack.c.b16 %v375, %v374
        %v388 = vpack.c.b16 %v377, %v376
        %v389 = vpack.c.b16 %v379, %v378
        %v390 = vpack.c.b16 %v381, %v380
        %v391 = vpack.c.b16 %v383, %v382
        %400 = vmatprep.subr.bf16.mxu0 0
        %401 = vmatpush1.bf16.msra.mxu0 %v391
        %402 = vmatprep.subr.bf16.mxu0 0
        %403 = vmatpush1.bf16.msra.mxu0 %v390
        %404 = vmatprep.subr.bf16.mxu0 0
        %405 = vmatpush1.bf16.msra.mxu0 %v389
        %406 = vmatprep.subr.bf16.mxu0 0
        %407 = vmatpush1.bf16.msra.mxu0 %v388
        %408 = vmatprep.subr.bf16.mxu0 0
        %409 = vmatpush1.bf16.msra.mxu0 %v387
        %410 = vmatprep.subr.bf16.mxu0 0
        %411 = vmatpush1.bf16.msra.mxu0 %v386
        %412 = vmatprep.subr.bf16.mxu0 0
        %413 = vmatpush1.bf16.msra.mxu0 %v385
        %414 = vmatprep.subr.bf16.mxu0 0
        %415 = vmatpush1.bf16.msra.mxu0 %v384
        %416 = vmatprep.subr.bf16.mxu0 0
        %417 = vmatpush2.bf16.msra.mxu0 0
        %418 = vmatprep.subr.bf16.mxu0 0
        %419 = vmatpush2.bf16.msra.mxu0 0
        %420 = vmatprep.subr.bf16.mxu0 0
        %421 = vmatpush2.bf16.msra.mxu0 0
        %422 = vmatprep.subr.bf16.mxu0 0
        %423 = vmatpush2.bf16.msra.mxu0 0
        %424 = vmatprep.subr.bf16.mxu0 0
        %425 = vmatpush2.bf16.msra.mxu0 0
        %426 = vmatprep.subr.bf16.mxu0 0
        %427 = vmatpush2.bf16.msra.mxu0 0
        %428 = vmatprep.subr.bf16.mxu0 0
        %429 = vmatpush2.bf16.msra.mxu0 0
        %430 = vmatprep.subr.bf16.mxu0 0
        %431 = vmatpush2.bf16.msra.mxu0 0
        %432 = vmatprep.mubr.bf16.mxu0 0
        %433 = vmatmul.mubr.bf16.gmra.mxu0 %v350
        %v434 = vpop.f32.mrf.mxu0
        %v435 = vadd.f32 0.0, %v434
        %v436 = vpop.f32.mrf.mxu0
        %v437 = vpop.f32.mrf.mxu0
        %v438 = vadd.f32 0.0, %v437
        %v439 = vpop.f32.mrf.mxu0
        %440 = vdwg.mxu0
        %v441 = vlaneseq
        %v442 = vand.u32 %v441, 127
        %vm443 = vcmp.lt.s32.totalorder %v442, 5
        %v444 = vsel %vm443, %v435, -1e+30
        %v445 = vsel %vm443, %v438, -1e+30
        %446 = vmax.xlane.f32.xlu0 %v444
        %v447 = vpop.xlane.xlu0 %446
        %448 = vmax.xlane.f32.xlu0 %v445
        %v449 = vpop.xlane.xlu0 %448
        %v450 = vsub.f32 %v444, %v447
        %v451 = vsub.f32 %v445, %v449
        %v452 = vmul.f32 %v450, 1.442695
        %v453 = vpow.pop %v452
        %v454 = vmul.f32 %v451, 1.442695
        %v455 = vpow.pop %v454
        %456 = vadd.xlane.f32.xlu0 %v453
        %v457 = vpop.xlane.xlu0 %456
        %458 = vadd.xlane.f32.xlu0 %v455
        %v459 = vpop.xlane.xlu0 %458
        %v460 = vrcp.pop %v457
        %v461 = vrcp.pop %v459
        %v462 = vmul.f32 %v453, %v460
        %v463 = vmul.f32 %v455, %v461
        %v464 = vpack.c.bf16 %v463, %v462
        %v465 = vld [vmem:[%s284] sm:$0xf]
        %v466 = vld [vmem:[%s284 + $0x4] sm:$0xf]
        %v467 = vld [vmem:[%s284 + $0x8] sm:$0xf]
        %v468 = vld [vmem:[%s284 + $0xc] sm:$0xf]
        %v469 = vld [vmem:[%s284 + $0x10] sm:$0xf]
        %v470 = vld [vmem:[%s284 + $0x14] sm:$0xf]
        %v471 = vld [vmem:[%s284 + $0x18] sm:$0xf]
        %v472 = vld [vmem:[%s284 + $0x1c] sm:$0xf]
        %v473 = vld [vmem:[%s284 + $0x20] sm:$0xf]
        %v474 = vld [vmem:[%s284 + $0x24] sm:$0xf]
        %v475 = vld [vmem:[%s284 + $0x28] sm:$0xf]
        %v476 = vld [vmem:[%s284 + $0x2c] sm:$0xf]
        %v477 = vld [vmem:[%s284 + $0x30] sm:$0xf]
        %v478 = vld [vmem:[%s284 + $0x34] sm:$0xf]
        %v479 = vld [vmem:[%s284 + $0x38] sm:$0xf]
        %v480 = vld [vmem:[%s284 + $0x3c] sm:$0xf]
        %v497 = vunpack.c.l.b16 %v465
        %v498 = vunpack.c.l.b16 %v466
        %v499 = vunpack.c.l.b16 %v467
        %v500 = vunpack.c.l.b16 %v468
        %v501 = vunpack.c.l.b16 %v469
        %v502 = vunpack.c.l.b16 %v470
        %v503 = vunpack.c.l.b16 %v471
        %v504 = vunpack.c.l.b16 %v472
        %v505 = vunpack.c.l.b16 %v473
        %v506 = vunpack.c.l.b16 %v474
        %v507 = vunpack.c.l.b16 %v475
        %v508 = vunpack.c.l.b16 %v476
        %v509 = vunpack.c.l.b16 %v477
        %v510 = vunpack.c.l.b16 %v478
        %v511 = vunpack.c.l.b16 %v479
        %v512 = vunpack.c.l.b16 %v480
        %v513 = vpack.c.b16 %v498, %v497
        %v514 = vpack.c.b16 %v500, %v499
        %v515 = vpack.c.b16 %v502, %v501
        %v516 = vpack.c.b16 %v504, %v503
        %v517 = vpack.c.b16 %v506, %v505
        %v518 = vpack.c.b16 %v508, %v507
        %v519 = vpack.c.b16 %v510, %v509
        %v520 = vpack.c.b16 %v512, %v511
        %529 = vmatprep.subr.bf16.mxu0 0
        %530 = vmatpush1.bf16.msra.mxu0 %v520
        %531 = vmatprep.subr.bf16.mxu0 0
        %532 = vmatpush1.bf16.msra.mxu0 %v519
        %533 = vmatprep.subr.bf16.mxu0 0
        %534 = vmatpush1.bf16.msra.mxu0 %v518
        %535 = vmatprep.subr.bf16.mxu0 0
        %536 = vmatpush1.bf16.msra.mxu0 %v517
        %537 = vmatprep.subr.bf16.mxu0 0
        %538 = vmatpush1.bf16.msra.mxu0 %v516
        %539 = vmatprep.subr.bf16.mxu0 0
        %540 = vmatpush1.bf16.msra.mxu0 %v515
        %541 = vmatprep.subr.bf16.mxu0 0
        %542 = vmatpush1.bf16.msra.mxu0 %v514
        %543 = vmatprep.subr.bf16.mxu0 0
        %544 = vmatpush1.bf16.msra.mxu0 %v513
        %545 = vmatprep.subr.bf16.mxu0 0
        %546 = vmatpush2.bf16.msra.mxu0 0
        %547 = vmatprep.subr.bf16.mxu0 0
        %548 = vmatpush2.bf16.msra.mxu0 0
        %549 = vmatprep.subr.bf16.mxu0 0
        %550 = vmatpush2.bf16.msra.mxu0 0
        %551 = vmatprep.subr.bf16.mxu0 0
        %552 = vmatpush2.bf16.msra.mxu0 0
        %553 = vmatprep.subr.bf16.mxu0 0
        %554 = vmatpush2.bf16.msra.mxu0 0
        %555 = vmatprep.subr.bf16.mxu0 0
        %556 = vmatpush2.bf16.msra.mxu0 0
        %557 = vmatprep.subr.bf16.mxu0 0
        %558 = vmatpush2.bf16.msra.mxu0 0
        %559 = vmatprep.subr.bf16.mxu0 0
        %560 = vmatpush2.bf16.msra.mxu0 0
        %561 = vmatprep.mubr.bf16.mxu0 0
        %562 = vmatmul.mubr.bf16.gmra.mxu0 %v464
        %v563 = vpop.f32.mrf.mxu0
        %v564 = vadd.f32 0.0, %v563
        %v565 = vpop.f32.mrf.mxu0
        %v566 = vpop.f32.mrf.mxu0
        %v567 = vadd.f32 0.0, %v566
        %v568 = vpop.f32.mrf.mxu0
        %569 = vdwg.mxu0
        %570 = vst [vmem:[%s316] sm:$0xff] %v564
        %571 = vst [vmem:[%s316 + $0x8] sm:$0xff] %v567
        %572 = vst [vmem:[%s323] sm:$0xff] %v462
        %573 = vst [vmem:[%s323 + $0x8] sm:$0xff] %v463
        %s574 = sand.u32 %s130, 1
        %s575 = scalar_lea.sflag [#allocation4], %s574
        %s576 = sand.u32 %s130, 1
        %s577 = smul.addr %s576, 16
        %s578 = scalar_lea.vmem [#allocation8], %s577
        %s579 = sand.u32 %s158, 1
        %s580 = scalar_lea.sflag [#allocation10], %s579
        %s581 = sand.u32 %s158, 1
        %s582 = smul.addr %s581, 16
        %s583 = scalar_lea.vmem [#allocation9], %s582
        // Predicated region
        $region45: #{tpu_custom_call.1} parent=31 // pred_check
          %p584 = pneg %p140
        $region46: #{tpu_custom_call.1} parent=31 // pred_check_branch
          %586 = sbr.rel (%p584) target = $region48
        $region47: #{tpu_custom_call.1} parent=31 // pred_region
          %s587 = smul.u32 2, %s33
          %s589 = ssub.s32 256, 256
          %590 = vsyncadd %s575, %s589
          %s591 = smul.addr %s32, 2
          %s592 = sadd.s32 %s587, %s591
          %s593 = smul.addr %s592, 128
          %s594 = scalar_lea.hbm %s3, %s593
          %s595 = sshll.u32 %s578, 4
          %s596 = int_to_ptr.vmem [resolvable:$true] %s595
          %601 = dma.vmem_to_hbm [thread:$0]  %s596, 256, %s594, %s575, 128, 128, 8
        $region48: #{tpu_custom_call.1} parent=31 // pred_fallthru
          _
        // Predicated region
        $region49: #{tpu_custom_call.1} parent=31 // pred_check
          %p602 = pneg %p168
        $region50: #{tpu_custom_call.1} parent=31 // pred_check_branch
          %604 = sbr.rel (%p602) target = $region52
        $region51: #{tpu_custom_call.1} parent=31 // pred_region
          %s605 = smul.u32 2, %s33
          %s607 = ssub.s32 256, 256
          %608 = vsyncadd %s580, %s607
          %s609 = smul.addr %s32, 2
          %s610 = sadd.s32 %s605, %s609
          %s611 = smul.addr %s610, 128
          %s612 = scalar_lea.hbm %s4, %s611
          %s613 = sshll.u32 %s583, 4
          %s614 = int_to_ptr.vmem [resolvable:$true] %s613
          %619 = dma.vmem_to_hbm [thread:$0]  %s614, 256, %s612, %s580, 128, 128, 8
        $region52: #{tpu_custom_call.1} parent=31 // pred_fallthru
          _
      $region32: #{tpu_custom_call.1} parent=5 // pred_fallthru
        _
      %p620 = scmp.le.s32.totalorder 2, %s23
      // Predicated region
      $region53: #{tpu_custom_call.1} parent=5 // pred_check
        %p621 = pneg %p620
      $region54: #{tpu_custom_call.1} parent=5 // pred_check_branch
        %623 = sbr.rel (%p621) target = $region56
      $region55: #{tpu_custom_call.1} parent=5 // pred_region
        %s624 = ssub.s32 %s23, 2
        // Predicated region
        $region57: #{tpu_custom_call.1} parent=55 // pred_check
          %p625 = pneg %p146
        $region58: #{tpu_custom_call.1} parent=55 // pred_check_branch
          %627 = sbr.rel (%p625) target = $region60
        $region59: #{tpu_custom_call.1} parent=55 // pred_region
          %s628 = sand.u32 %s131, 1
          %s629 = scalar_lea.sflag [#allocation4], %s628
          %s630 = sand.u32 %s131, 1
          %s631 = smul.addr %s630, 16
          %s632 = scalar_lea.vmem [#allocation8], %s631
          %633 = dma.done %s629, 256
        $region60: #{tpu_custom_call.1} parent=55 // pred_fallthru
          _
        // Predicated region
        $region61: #{tpu_custom_call.1} parent=55 // pred_check
          %p634 = pneg %p174
        $region62: #{tpu_custom_call.1} parent=55 // pred_check_branch
          %636 = sbr.rel (%p634) target = $region64
        $region63: #{tpu_custom_call.1} parent=55 // pred_region
          %s637 = sand.u32 %s159, 1
          %s638 = scalar_lea.sflag [#allocation10], %s637
          %s639 = sand.u32 %s159, 1
          %s640 = smul.addr %s639, 16
          %s641 = scalar_lea.vmem [#allocation9], %s640
          %642 = dma.done %s638, 256
        $region64: #{tpu_custom_call.1} parent=55 // pred_fallthru
          _
      $region56: #{tpu_custom_call.1} parent=5 // pred_fallthru
        _
    $region6: #{tpu_custom_call.1} parent=1 // loop_footer
      %s27 = sadd.s32 1, %s23
    $region7: #{tpu_custom_call.1} parent=1 // loop_footer_branch
      %22 = sbr.rel target = $region3
    $region8: #{tpu_custom_call.1} parent=1 // loop_exit
      _
    %643 = vsyncpa [#allocation3], 1
    %s644 = scalar_lea.sflag [#allocation3], 1
    %645 = vsyncpa %s644, 1
    %646 = vsyncpa [#allocation6], 1
    %s647 = scalar_lea.sflag [#allocation6], 1
    %648 = vsyncpa %s647, 1
    %649 = vsyncpa [#allocation4], 1
    %s650 = scalar_lea.sflag [#allocation4], 1
    %651 = vsyncpa %s650, 1
    %652 = vsyncpa [#allocation10], 1
    %s653 = scalar_lea.sflag [#allocation10], 1
    %654 = vsyncpa %s653, 1

</llo_original>
